<compile_context>
chip_gen: v7x
topology: tpu7x:2x2x1
jax: 0.10.0
libtpu: 0.0.40
codegen_flags: <defaults>
</compile_context>

<pallas_src>
import functools

import numpy as np
import jax
import jax.numpy as jnp
from jax import lax
from jax.experimental import pallas as pl
from jax.experimental.pallas import tpu as pltpu


def _conv_bn_relu_kernel(x_ref, b_ref, scale_ref, shift_ref, o_ref, a_ref, *,
                         nb, kh, dilation, pad, h, h_out, wc, add_relu):
    # x_ref:     [nb, H, W*C_in]            bf16  (unpadded NHWC image(s), W*C_in on lanes)
    # b_ref:     [Kh*W*C_in, W_out*C_out]   bf16  (banded weights, resident / constant index map)
    # scale_ref: [1, W_out*C_out]           f32   (BN scale, tiled over W_out)
    # shift_ref: [1, W_out*C_out]           f32   (conv bias + BN shift, tiled over W_out)
    # o_ref:     [nb, H_out, W_out*C_out]         (lane-dense output tile)
    # a_ref:     [nb*H_out, Kh*W*C_in]      bf16  (VMEM scratch: assembled row-window slab)

    # ---- assemble the Kh shifted row windows into one A slab (static slices only) ----------
    for i in range(nb):
        for t in range(kh):
            lo, hi = t * wc, (t + 1) * wc
            r_lo = max(0, pad - t * dilation)                 # first valid output row for tap t
            r_hi = min(h_out, h + pad - t * dilation)         # one past last valid output row
            # rows falling in the H zero-padding halo contribute zeros
            if r_lo > 0:
                a_ref[i * h_out: i * h_out + r_lo, lo:hi] = jnp.zeros((r_lo, wc), a_ref.dtype)
            if r_hi < h_out:
                a_ref[i * h_out + r_hi: (i + 1) * h_out, lo:hi] = (
                    jnp.zeros((h_out - r_hi, wc), a_ref.dtype))
            if r_hi > r_lo:
                a_ref[i * h_out + r_lo: i * h_out + r_hi, lo:hi] = (
                    x_ref[i, r_lo + t * dilation - pad: r_hi + t * dilation - pad, :])

    # ---- single fused MXU matmul: [nb*H_out, Kh*W*C_in] @ [Kh*W*C_in, W_out*C_out] ----------
    acc = jnp.dot(a_ref[...], b_ref[...], preferred_element_type=jnp.float32)

    # ---- epilogue: f32 BN scale (unscaled bf16 weights -> better accuracy), shift, ReLU -----
    y = acc * scale_ref[...] + shift_ref[...]
    if add_relu:
        y = jnp.maximum(y, 0.0)
    for i in range(nb):
        o_ref[i] = y[i * h_out: (i + 1) * h_out, :].astype(o_ref.dtype)


def make_conv_bn_relu_params(weight, bias, gamma, beta, running_mean, running_var,
                             *, w, stride=1, padding=0, dilation=1, eps=1e-5, add_bn=True):
    """Built ONCE at model setup (weights constant at inference).

    Returns (b2d, scale_row, shift_row):
      b2d       [Kh*W*C_in, W_out*C_out]  bf16 — Kw taps + W-padding folded in, UNscaled.
      scale_row [1, W_out*C_out]          f32  — BN scale, lane order (wo*C_out + c).
      shift_row [1, W_out*C_out]          f32  — conv bias + BN shift, same lane order.
    Specialized to the spatial width `w` (rebuild if the input resolution changes).
    """
    c_out, c_in, kh, kw = weight.shape
    assert stride == 1, "TODO(synk): stride > 1 not implemented in the Pallas kernel"
    w_out = w + 2 * padding - dilation * (kw - 1)

    # sel[x_tap, w_in, wo] = 1 where unpadded input column w_in feeds output column wo via tap
    # x_tap; columns falling in the W zero-padding simply never appear (contribute nothing).
    sel = np.zeros((kw, w, w_out), np.float32)
    for x_tap in range(kw):
        for wo in range(w_out):
            w_in = wo * stride + x_tap * dilation - padding
            if 0 <= w_in < w:
                sel[x_tap, w_in, wo] = 1.0

    b = jnp.einsum("xvw,oiyx->yviwo", jnp.asarray(sel), weight.astype(jnp.float32))
    b2d = b.reshape(kh * w * c_in, w_out * c_out).astype(jnp.bfloat16)

    bias_v = (bias if bias is not None else jnp.zeros((c_out,), jnp.float32)).astype(jnp.float32)
    if add_bn:
        inv_std = 1.0 / jnp.sqrt(running_var.astype(jnp.float32) + eps)
        scale = gamma.astype(jnp.float32) * inv_std
        shift = beta.astype(jnp.float32) + (bias_v - running_mean.astype(jnp.float32)) * scale
    else:
        scale = jnp.ones((c_out,), jnp.float32)
        shift = bias_v

    scale_row = jnp.tile(scale, w_out).reshape(1, w_out * c_out).astype(jnp.float32)
    shift_row = jnp.tile(shift, w_out).reshape(1, w_out * c_out).astype(jnp.float32)
    return b2d, scale_row, shift_row


def _pick_batch_block(n, h_out, m_cap=512):
    """Largest batch block dividing n with >= 2 grid steps (v7x: 2 TCs) and M <= m_cap."""
    nb = 1
    for cand in range(1, n + 1):
        if n % cand:
            continue
        if cand * h_out > m_cap:
            break
        if n == 1 or (n // cand) >= 2:
            nb = cand
    return nb


def conv_bn_relu_nhwc(x_nhwc, b2d, scale_row, shift_row, *, c_out, kh, kw,
                      stride=1, padding=0, dilation=1, add_relu=True,
                      out_dtype=jnp.float32, batch_block=None):
    """Fast path: NHWC in -> NHWC out. No padding / transposes outside the kernel."""
    n, h, w, c_in = x_nhwc.shape
    assert stride == 1, "TODO(synk): stride > 1 not implemented in the Pallas kernel"
    h_out = h + 2 * padding - dilation * (kh - 1)
    w_out = w + 2 * padding - dilation * (kw - 1)
    wc = w * c_in
    k_dim = kh * wc
    woc = w_out * c_out
    assert b2d.shape == (k_dim, woc), (b2d.shape, (k_dim, woc))

    nb = batch_block if batch_block is not None else _pick_batch_block(n, h_out)
    assert n % nb == 0, (n, nb)

    # Pure view reshape + bf16 cast — the only wrapper-side touch of the activations.
    x_flat = x_nhwc.reshape(n, h, wc).astype(jnp.bfloat16)

    out_itemsize = jnp.dtype(out_dtype).itemsize
    vmem_est = (2 * nb * h * wc * 2          # x block (double buffered)
                + 2 * k_dim * woc * 2        # banded weights
                + 2 * 2 * woc * 4            # scale + shift rows
                + 2 * nb * h_out * woc * out_itemsize   # output block
                + nb * h_out * k_dim * 2)    # A scratch
    vmem_limit = int(min(max(2 * vmem_est, 32 * 1024 * 1024), 64 * 1024 * 1024))

    kernel = functools.partial(
        _conv_bn_relu_kernel, nb=nb, kh=kh, dilation=dilation, pad=padding,
        h=h, h_out=h_out, wc=wc, add_relu=add_relu)

    out_flat = pl.pallas_call(
        kernel,
        out_shape=jax.ShapeDtypeStruct((n, h_out, woc), out_dtype),
        grid_spec=pltpu.PrefetchScalarGridSpec(
            num_scalar_prefetch=0,
            grid=(n // nb,),
            in_specs=[
                # nb unpadded images per grid step
                pl.BlockSpec((nb, h, wc), lambda i: (i, 0, 0)),
                # banded weights / scale / shift: constant index map -> DMA'd once, resident
                pl.BlockSpec((k_dim, woc), lambda i: (0, 0)),
                pl.BlockSpec((1, woc), lambda i: (0, 0)),
                pl.BlockSpec((1, woc), lambda i: (0, 0)),
            ],
            out_specs=pl.BlockSpec((nb, h_out, woc), lambda i: (i, 0, 0)),
            scratch_shapes=[pltpu.VMEM((nb * h_out, k_dim), jnp.bfloat16)],
        ),
        compiler_params=pltpu.CompilerParams(
            dimension_semantics=("parallel",),
            vmem_limit_bytes=vmem_limit),
    )(x_flat, b2d, scale_row, shift_row)

    return out_flat.reshape(n, h_out, w_out, c_out)


def conv_bn_relu_nchw(x_nchw, b2d, scale_row, shift_row, **kwargs):
    """PyTorch-module-contract adapter (NCHW in/out). The two transposes here are boundary
    layout work only; keep the model NHWC end-to-end and call conv_bn_relu_nhwc directly."""
    x_nhwc = jnp.transpose(x_nchw, (0, 2, 3, 1))
    y = conv_bn_relu_nhwc(x_nhwc, b2d, scale_row, shift_row, **kwargs)
    return jnp.transpose(y, (0, 3, 1, 2))


def _reference(x, weight, bias, gamma, beta, running_mean, running_var,
               *, stride, padding, dilation, eps=1e-5, add_bn=True, add_relu=True):
    y = lax.conv_general_dilated(
        x.astype(jnp.float32), weight.astype(jnp.float32),
        window_strides=(stride, stride),
        padding=[(padding, padding), (padding, padding)],
        rhs_dilation=(dilation, dilation),
        dimension_numbers=("NCHW", "OIHW", "NCHW"),
        precision=lax.Precision.HIGHEST)
    if bias is not None:
        y = y + bias.reshape(1, -1, 1, 1)
    if add_bn:
        inv_std = 1.0 / jnp.sqrt(running_var + eps)
        y = (y - running_mean.reshape(1, -1, 1, 1)) * (gamma * inv_std).reshape(1, -1, 1, 1) \
            + beta.reshape(1, -1, 1, 1)
    if add_relu:
        y = jnp.maximum(y, 0.0)
    return y


if __name__ == "__main__":
    # ConvBnRelu(in_channels=4, out_channels=8, kernel_size=3, stride=1, padding=1,
    #            add_bn=True, add_relu=True, bias=True, interpolate=False)
    N, C_IN, H, W = 2, 4, 16, 16
    C_OUT, KSIZE, STRIDE, PAD, DIL = 8, 3, 1, 1, 1

    key = jax.random.PRNGKey(0)
    kx, kw_, kb, kg, kbe, km, kv = jax.random.split(key, 7)

    x = jax.random.normal(kx, (N, C_IN, H, W), jnp.float32)
    weight = jax.random.normal(kw_, (C_OUT, C_IN, KSIZE, KSIZE), jnp.float32) * 0.1
    bias = jax.random.normal(kb, (C_OUT,), jnp.float32) * 0.1
    gamma = 1.0 + 0.1 * jax.random.normal(kg, (C_OUT,), jnp.float32)
    beta = 0.1 * jax.random.normal(kbe, (C_OUT,), jnp.float32)
    running_mean = 0.1 * jax.random.normal(km, (C_OUT,), jnp.float32)
    running_var = 1.0 + 0.1 * jax.random.uniform(kv, (C_OUT,), jnp.float32)

    # ---- model setup: banded weights / scale / shift built ONCE (hoisted out of forward) ----
    b2d, scale_row, shift_row = make_conv_bn_relu_params(
        weight, bias, gamma, beta, running_mean, running_var,
        w=W, stride=STRIDE, padding=PAD, dilation=DIL, add_bn=True)

    fwd = jax.jit(functools.partial(
        conv_bn_relu_nchw, c_out=C_OUT, kh=KSIZE, kw=KSIZE,
        stride=STRIDE, padding=PAD, dilation=DIL, add_relu=True,
        out_dtype=jnp.float32))
    out = fwd(x, b2d, scale_row, shift_row)
    out = jax.block_until_ready(out)
    assert out.shape == (N, C_OUT, H, W), out.shape

    # 1) Tight check against a bf16-consistent reference (bf16 x, bf16 unscaled weights,
    #    f32 accumulation, f32 BN scale/shift epilogue): verifies the band construction +
    #    in-kernel window assembly + epilogue up to f32 accumulation order.
    scale = gamma / jnp.sqrt(running_var + 1e-5)
    shift = beta + (bias - running_mean) * scale
    x_bf = x.astype(jnp.bfloat16).astype(jnp.float32)
    w_bf = weight.astype(jnp.bfloat16).astype(jnp.float32)
    conv_bf = lax.conv_general_dilated(
        x_bf, w_bf, (STRIDE, STRIDE), [(PAD, PAD), (PAD, PAD)],
        rhs_dilation=(DIL, DIL), dimension_numbers=("NCHW", "OIHW", "NCHW"),
        precision=lax.Precision.HIGHEST)
    ref_tight = jnp.maximum(conv_bf * scale.reshape(1, -1, 1, 1) + shift.reshape(1, -1, 1, 1), 0.0)
    err_tight = float(jnp.max(jnp.abs(out - ref_tight)))
    assert err_tight < 1e-3, err_tight

    # 2) Loose check against the exact f32 module reference (bf16 operand rounding only).
    ref = _reference(x, weight, bias, gamma, beta, running_mean, running_var,
                     stride=STRIDE, padding=PAD, dilation=DIL)
    err = float(jnp.max(jnp.abs(out - ref)))
    assert jnp.allclose(out, ref, atol=5e-2, rtol=5e-2), err

    print("KERNEL_OK")
</pallas_src>

<mosaic_0001>
module attributes {stable_mosaic.version = 11 : i64} {
  func.func @_conv_bn_relu_kernel(%arg0: i32, %arg1: memref<1x16x64xbf16, #tpu.memory_space<vmem>>, %arg2: memref<192x128xbf16, #tpu.memory_space<vmem>>, %arg3: memref<1x128xf32, #tpu.memory_space<vmem>>, %arg4: memref<1x128xf32, #tpu.memory_space<vmem>>, %arg5: memref<1x16x128xf32, #tpu.memory_space<vmem>>, %arg6: memref<16x192xbf16, #tpu.memory_space<vmem>>) attributes {dimension_semantics = [#tpu.dimension_semantics<parallel>], iteration_bounds = array<i64: 2>, scalar_prefetch = 0 : i64, scratch_operands = 1 : i64, tpu.core_type = #tpu.core_type<tc>, window_params = [{transform_indices = @transform_0, window_bounds = array<i64: 1, 16, 64>}, {pipeline_mode = #tpu.pipeline_mode<synchronous>, transform_indices = @transform_1, window_bounds = array<i64: 192, 128>}, {pipeline_mode = #tpu.pipeline_mode<synchronous>, transform_indices = @transform_2, window_bounds = array<i64: 1, 128>}, {pipeline_mode = #tpu.pipeline_mode<synchronous>, transform_indices = @transform_3, window_bounds = array<i64: 1, 128>}, {transform_indices = @transform_4, window_bounds = array<i64: 1, 16, 128>}]} {
    %cst = arith.constant 0.000000e+00 : bf16
    %0 = vector.broadcast %cst : bf16 to vector<1x64xbf16>
    %c0 = arith.constant 0 : index
    %c0_0 = arith.constant 0 : index
    %1 = vector.load %arg6[%c0, %c0_0] : memref<16x192xbf16, #tpu.memory_space<vmem>>, vector<1x64xbf16>
    tpu.vector_store %arg6[%c0, %c0_0], %0 {strides = array<i32>} : memref<16x192xbf16, #tpu.memory_space<vmem>>, vector<1x64xbf16>,
    %c0_1 = arith.constant 0 : index
    %c0_2 = arith.constant 0 : index
    %c0_3 = arith.constant 0 : index
    %2 = vector.load %arg1[%c0_1, %c0_2, %c0_3] : memref<1x16x64xbf16, #tpu.memory_space<vmem>>, vector<1x15x64xbf16>
    %3 = vector.shape_cast %2 : vector<1x15x64xbf16> to vector<15x64xbf16>
    %c1 = arith.constant 1 : index
    %c0_4 = arith.constant 0 : index
    %4 = vector.load %arg6[%c1, %c0_4] : memref<16x192xbf16, #tpu.memory_space<vmem>>, vector<15x64xbf16>
    tpu.vector_store %arg6[%c1, %c0_4], %3 {strides = array<i32>} : memref<16x192xbf16, #tpu.memory_space<vmem>>, vector<15x64xbf16>,
    %c0_5 = arith.constant 0 : index
    %c0_6 = arith.constant 0 : index
    %c0_7 = arith.constant 0 : index
    %5 = vector.load %arg1[%c0_5, %c0_6, %c0_7] : memref<1x16x64xbf16, #tpu.memory_space<vmem>>, vector<1x16x64xbf16>
    %6 = vector.shape_cast %5 : vector<1x16x64xbf16> to vector<16x64xbf16>
    %c0_8 = arith.constant 0 : index
    %c64 = arith.constant 64 : index
    %7 = vector.load %arg6[%c0_8, %c64] : memref<16x192xbf16, #tpu.memory_space<vmem>>, vector<16x64xbf16>
    tpu.vector_store %arg6[%c0_8, %c64], %6 {strides = array<i32>} : memref<16x192xbf16, #tpu.memory_space<vmem>>, vector<16x64xbf16>,
    %cst_9 = arith.constant 0.000000e+00 : bf16
    %8 = vector.broadcast %cst_9 : bf16 to vector<1x64xbf16>
    %c15 = arith.constant 15 : index
    %c128 = arith.constant 128 : index
    %9 = vector.load %arg6[%c15, %c128] : memref<16x192xbf16, #tpu.memory_space<vmem>>, vector<1x64xbf16>
    tpu.vector_store %arg6[%c15, %c128], %8 {strides = array<i32>} : memref<16x192xbf16, #tpu.memory_space<vmem>>, vector<1x64xbf16>,
    %c0_10 = arith.constant 0 : index
    %c1_11 = arith.constant 1 : index
    %c0_12 = arith.constant 0 : index
    %10 = vector.load %arg1[%c0_10, %c1_11, %c0_12] : memref<1x16x64xbf16, #tpu.memory_space<vmem>>, vector<1x15x64xbf16>
    %11 = vector.shape_cast %10 : vector<1x15x64xbf16> to vector<15x64xbf16>
    %c0_13 = arith.constant 0 : index
    %c128_14 = arith.constant 128 : index
    %12 = vector.load %arg6[%c0_13, %c128_14] : memref<16x192xbf16, #tpu.memory_space<vmem>>, vector<15x64xbf16>
    tpu.vector_store %arg6[%c0_13, %c128_14], %11 {strides = array<i32>} : memref<16x192xbf16, #tpu.memory_space<vmem>>, vector<15x64xbf16>,
    %c0_15 = arith.constant 0 : index
    %c0_16 = arith.constant 0 : index
    %13 = vector.load %arg6[%c0_15, %c0_16] : memref<16x192xbf16, #tpu.memory_space<vmem>>, vector<16x192xbf16>
    %c0_17 = arith.constant 0 : index
    %c0_18 = arith.constant 0 : index
    %14 = vector.load %arg2[%c0_17, %c0_18] : memref<192x128xbf16, #tpu.memory_space<vmem>>, vector<192x128xbf16>
    %cst_19 = arith.constant dense<0.000000e+00> : vector<16x128xf32>
    %15 = tpu.matmul %13, %14, %cst_19 {dimension_numbers = #tpu.dot_dimension_numbers<[1], [0], [0], [1], [0, 0, 1, 1], [], []>} : vector<16x192xbf16>, vector<192x128xbf16>, vector<16x128xf32> -> vector<16x128xf32>
    %c0_20 = arith.constant 0 : index
    %c0_21 = arith.constant 0 : index
    %16 = vector.load %arg3[%c0_20, %c0_21] : memref<1x128xf32, #tpu.memory_space<vmem>>, vector<1x128xf32>
    %17 = vector.broadcast %16 : vector<1x128xf32> to vector<16x128xf32>
    %18 = arith.mulf %15, %17 : vector<16x128xf32>
    %c0_22 = arith.constant 0 : index
    %c0_23 = arith.constant 0 : index
    %19 = vector.load %arg4[%c0_22, %c0_23] : memref<1x128xf32, #tpu.memory_space<vmem>>, vector<1x128xf32>
    %20 = vector.broadcast %19 : vector<1x128xf32> to vector<16x128xf32>
    %21 = arith.addf %18, %20 : vector<16x128xf32>
    %cst_24 = arith.constant 0.000000e+00 : f32
    %22 = vector.broadcast %cst_24 : f32 to vector<16x128xf32>
    %23 = arith.maximumf %21, %22 : vector<16x128xf32>
    %c0_25 = arith.constant 0 : index
    %c0_26 = arith.constant 0 : index
    %c0_27 = arith.constant 0 : index
    %24 = vector.load %arg5[%c0_25, %c0_26, %c0_27] : memref<1x16x128xf32, #tpu.memory_space<vmem>>, vector<1x16x128xf32>
    %25 = vector.shape_cast %24 : vector<1x16x128xf32> to vector<16x128xf32>
    %26 = vector.shape_cast %23 : vector<16x128xf32> to vector<1x16x128xf32>
    tpu.vector_store %arg5[%c0_25, %c0_26, %c0_27], %26 {strides = array<i32>} : memref<1x16x128xf32, #tpu.memory_space<vmem>>, vector<1x16x128xf32>,
    return
  }
  func.func @transform_0(%arg0: i32) -> (i32, i32, i32) {
    %c0_i32 = arith.constant 0 : i32
    %c0_i32_0 = arith.constant 0 : i32
    %c0_i32_1 = arith.constant 0 : i32
    return %arg0, %c0_i32, %c0_i32_0 : i32, i32, i32
  }
  func.func @transform_1(%arg0: i32) -> (i32, i32) {
    %c0_i32 = arith.constant 0 : i32
    %c0_i32_0 = arith.constant 0 : i32
    %c0_i32_1 = arith.constant 0 : i32
    return %c0_i32, %c0_i32_0 : i32, i32
  }
  func.func @transform_2(%arg0: i32) -> (i32, i32) {
    %c0_i32 = arith.constant 0 : i32
    %c0_i32_0 = arith.constant 0 : i32
    %c0_i32_1 = arith.constant 0 : i32
    return %c0_i32, %c0_i32_0 : i32, i32
  }
  func.func @transform_3(%arg0: i32) -> (i32, i32) {
    %c0_i32 = arith.constant 0 : i32
    %c0_i32_0 = arith.constant 0 : i32
    %c0_i32_1 = arith.constant 0 : i32
    return %c0_i32, %c0_i32_0 : i32, i32
  }
  func.func @transform_4(%arg0: i32) -> (i32, i32, i32) {
    %c0_i32 = arith.constant 0 : i32
    %c0_i32_0 = arith.constant 0 : i32
    %c0_i32_1 = arith.constant 0 : i32
    return %arg0, %c0_i32, %c0_i32_0 : i32, i32, i32
  }
}

</mosaic_0001>

<llo_original>
// kernel: conv_bn_relu_nchw.1
$region0: #{conv_bn_relu_nchw.1}
  #allocation0 [shape = 'u32[]', space=smem, size = 0x4, offset = 0x4, fixed_abs, tag = 'smem constant byte address 0x4 - core index']
  #allocation1 [shape = 'u32[144,128]{1,0:T(1,128)}', space=vmem, size = 0x12000, scoped, tag = 'internal scratch']
  #allocation2 [shape = 'bf16[16,192]{1,0:T(16,128)(2,1)}', space=vmem, size = 0x2000, scoped, tag = 'scratch operand']
  %s0 = inlined_call_operand.vmem [shape: bf16[2,16,64], index: 0, kind: input, shape index: {}]
  %s1 = inlined_call_operand.vmem [shape: bf16[192,128], index: 1, kind: input, shape index: {}]
  %s2 = inlined_call_operand.vmem [shape: f32[1,128], index: 2, kind: input, shape index: {}]
  %s3 = inlined_call_operand.vmem [shape: f32[1,128], index: 3, kind: input, shape index: {}]
  %s4 = inlined_call_operand.vmem [shape: f32[2,16,128], index: 4, kind: output, shape index: {}]
  %s5 = sld [smem:[#allocation0]]
  $region49: #{conv_bn_relu_nchw.1} parent=0
    _
  %s7 = ssub.s32 1, %s5
  %s8 = scalar_select 0, %s7, %s5
  loop: start=0, step=1, limit=4
  $region2: #{conv_bn_relu_nchw.1} parent=0 // loop_pre_header
    _
  $region3: #{conv_bn_relu_nchw.1} parent=0 // loop_header
    %s10 = sphi 0, %s14
    %p11 = scmp.ge.s32.totalorder %s10, 4
    %s20 = sphi 0, %s22
    %s23 = sphi 0, %s20
    %s24 = sphi 0, %s23
    %s40 = sphi 0, %s24
    %s44 = sphi 0, %s44
    %s46 = sphi 0, %s44
    %s47 = sphi 0, %s46
    %s61 = sphi 0, %s47
    %s65 = sphi 0, %s65
    %s67 = sphi 0, %s65
    %s68 = sphi 0, %s67
    %s82 = sphi 0, %s68
    %s86 = sphi 0, %s86
    %s88 = sphi 0, %s86
    %s89 = sphi 0, %s88
    %s103 = sphi 0, %s89
    %s109 = sphi 0, %s111
    %s112 = sphi 0, %s109
    %s113 = sphi 0, %s112
    %s129 = sphi 0, %s113
  $region4: #{conv_bn_relu_nchw.1} parent=0 // loop_header_branch
    %13 = sbr.rel (%p11) target = $region8
  $region5: #{conv_bn_relu_nchw.1} parent=0 // loop_body
    %s15 = ssub.s32 %s10, 1
    %s16 = ssub.s32 %s10, 2
    %s17 = sadd.s32 %s10, 1
    %s18 = ssub.s32 %s10, %s17
    %p19 = scmp.eq.s32.totalorder %s18, 0
    %s21 = sadd.s32 %s20, 1
    %s22 = scalar_select %p19, %s20, %s21
    %p25 = pneg %p19
    %p26 = scmp.eq.s32.totalorder %s10, 1
    %p27 = por %p25, %p26
    %p28 = scmp.ne.s32.totalorder %s20, %s23
    %p29 = scmp.eq.s32.totalorder %s10, 0
    %p30 = por %p28, %p29
    %p31 = scmp.ne.s32.totalorder %s20, %s23
    %p32 = scmp.eq.s32.totalorder %s15, 1
    %p33 = por %p31, %p32
    %p34 = scmp.ne.s32.totalorder %s23, %s24
    %p35 = scmp.eq.s32.totalorder %s15, 0
    %p36 = por %p34, %p35
    %p37 = scmp.ne.s32.totalorder %s23, %s24
    %p38 = scmp.eq.s32.totalorder %s16, 1
    %p39 = por %p37, %p38
    %p41 = scmp.ne.s32.totalorder %s24, %s40
    %p42 = scmp.eq.s32.totalorder %s16, 0
    %p43 = por %p41, %p42
    %s45 = sadd.s32 %s44, 1
    %p48 = scmp.eq.s32.totalorder %s10, 1
    %p49 = scmp.ne.s32.totalorder %s44, %s46
    %p50 = scmp.eq.s32.totalorder %s10, 0
    %p51 = por %p49, %p50
    %p52 = scmp.ne.s32.totalorder %s44, %s46
    %p53 = scmp.eq.s32.totalorder %s15, 1
    %p54 = por %p52, %p53
    %p55 = scmp.ne.s32.totalorder %s46, %s47
    %p56 = scmp.eq.s32.totalorder %s15, 0
    %p57 = por %p55, %p56
    %p58 = scmp.ne.s32.totalorder %s46, %s47
    %p59 = scmp.eq.s32.totalorder %s16, 1
    %p60 = por %p58, %p59
    %p62 = scmp.ne.s32.totalorder %s47, %s61
    %p63 = scmp.eq.s32.totalorder %s16, 0
    %p64 = por %p62, %p63
    %s66 = sadd.s32 %s65, 1
    %p69 = scmp.eq.s32.totalorder %s10, 1
    %p70 = scmp.ne.s32.totalorder %s65, %s67
    %p71 = scmp.eq.s32.totalorder %s10, 0
    %p72 = por %p70, %p71
    %p73 = scmp.ne.s32.totalorder %s65, %s67
    %p74 = scmp.eq.s32.totalorder %s15, 1
    %p75 = por %p73, %p74
    %p76 = scmp.ne.s32.totalorder %s67, %s68
    %p77 = scmp.eq.s32.totalorder %s15, 0
    %p78 = por %p76, %p77
    %p79 = scmp.ne.s32.totalorder %s67, %s68
    %p80 = scmp.eq.s32.totalorder %s16, 1
    %p81 = por %p79, %p80
    %p83 = scmp.ne.s32.totalorder %s68, %s82
    %p84 = scmp.eq.s32.totalorder %s16, 0
    %p85 = por %p83, %p84
    %s87 = sadd.s32 %s86, 1
    %p90 = scmp.eq.s32.totalorder %s10, 1
    %p91 = scmp.ne.s32.totalorder %s86, %s88
    %p92 = scmp.eq.s32.totalorder %s10, 0
    %p93 = por %p91, %p92
    %p94 = scmp.ne.s32.totalorder %s86, %s88
    %p95 = scmp.eq.s32.totalorder %s15, 1
    %p96 = por %p94, %p95
    %p97 = scmp.ne.s32.totalorder %s88, %s89
    %p98 = scmp.eq.s32.totalorder %s15, 0
    %p99 = por %p97, %p98
    %p100 = scmp.ne.s32.totalorder %s88, %s89
    %p101 = scmp.eq.s32.totalorder %s16, 1
    %p102 = por %p100, %p101
    %p104 = scmp.ne.s32.totalorder %s89, %s103
    %p105 = scmp.eq.s32.totalorder %s16, 0
    %p106 = por %p104, %p105
    %s107 = ssub.s32 %s10, %s17
    %p108 = scmp.eq.s32.totalorder %s107, 0
    %s110 = sadd.s32 %s109, 1
    %s111 = scalar_select %p108, %s109, %s110
    %p114 = pneg %p108
    %p115 = scmp.eq.s32.totalorder %s10, 1
    %p116 = por %p114, %p115
    %p117 = scmp.ne.s32.totalorder %s109, %s112
    %p118 = scmp.eq.s32.totalorder %s10, 0
    %p119 = por %p117, %p118
    %p120 = scmp.ne.s32.totalorder %s109, %s112
    %p121 = scmp.eq.s32.totalorder %s15, 1
    %p122 = por %p120, %p121
    %p123 = scmp.ne.s32.totalorder %s112, %s113
    %p124 = scmp.eq.s32.totalorder %s15, 0
    %p125 = por %p123, %p124
    %p126 = scmp.ne.s32.totalorder %s112, %s113
    %p127 = scmp.eq.s32.totalorder %s16, 1
    %p128 = por %p126, %p127
    %p130 = scmp.ne.s32.totalorder %s113, %s129
    %p131 = scmp.eq.s32.totalorder %s16, 0
    %p132 = por %p130, %p131
    %p133 = scmp.le.s32.totalorder 1, %s10
    %p134 = scmp.lt.s32.totalorder %s10, 3
    %p135 = pnand %p133, %p134
    %p136 = pneg %p135
    // Predicated region
    $region9: #{conv_bn_relu_nchw.1} parent=5 // pred_check
      _
    $region10: #{conv_bn_relu_nchw.1} parent=5 // pred_check_branch
      %138 = sbr.rel (%p135) target = $region12
    $region11: #{conv_bn_relu_nchw.1} parent=5 // pred_region
      %s139 = ssub.s32 %s10, 1
      // Predicated region
      $region13: #{conv_bn_relu_nchw.1} parent=11 // pred_check
        %p140 = pneg %p57
      $region14: #{conv_bn_relu_nchw.1} parent=11 // pred_check_branch
        %142 = sbr.rel (%p140) target = $region16
      $region15: #{conv_bn_relu_nchw.1} parent=11 // pred_region
        _
      $region16: #{conv_bn_relu_nchw.1} parent=11 // pred_fallthru
        _
      // Predicated region
      $region17: #{conv_bn_relu_nchw.1} parent=11 // pred_check
        %p143 = pneg %p78
      $region18: #{conv_bn_relu_nchw.1} parent=11 // pred_check_branch
        %145 = sbr.rel (%p143) target = $region20
      $region19: #{conv_bn_relu_nchw.1} parent=11 // pred_region
        _
      $region20: #{conv_bn_relu_nchw.1} parent=11 // pred_fallthru
        _
      // Predicated region
      $region21: #{conv_bn_relu_nchw.1} parent=11 // pred_check
        %p146 = pneg %p99
      $region22: #{conv_bn_relu_nchw.1} parent=11 // pred_check_branch
        %148 = sbr.rel (%p146) target = $region24
      $region23: #{conv_bn_relu_nchw.1} parent=11 // pred_region
        _
      $region24: #{conv_bn_relu_nchw.1} parent=11 // pred_fallthru
        _
    $region12: #{conv_bn_relu_nchw.1} parent=5 // pred_fallthru
      _
    %p149 = scmp.lt.s32.totalorder %s10, 2
    // Predicated region
    $region25: #{conv_bn_relu_nchw.1} parent=5 // pred_check
      %p150 = pneg %p149
    $region26: #{conv_bn_relu_nchw.1} parent=5 // pred_check_branch
      %152 = sbr.rel (%p150) target = $region28
    $region27: #{conv_bn_relu_nchw.1} parent=5 // pred_region
      // Predicated region
      $region29: #{conv_bn_relu_nchw.1} parent=27 // pred_check
        %p153 = pneg %p30
      $region30: #{conv_bn_relu_nchw.1} parent=27 // pred_check_branch
        %155 = sbr.rel (%p153) target = $region32
      $region31: #{conv_bn_relu_nchw.1} parent=27 // pred_region
        %p156 = scmp.lt.s32.totalorder %s10, 1
        %s157 = scalar_select %p156, %s10, 1
        %s158 = smul.addr %s157, 2
        %s159 = smul.addr %s158, 4
        %s160 = scalar_lea.vmem %s0, %s159
      $region32: #{conv_bn_relu_nchw.1} parent=27 // pred_fallthru
        _
    $region28: #{conv_bn_relu_nchw.1} parent=5 // pred_fallthru
      _
    %p161 = scmp.le.s32.totalorder 1, %s10
    %p162 = scmp.lt.s32.totalorder %s10, 3
    %p163 = pnand %p161, %p162
    %p164 = pneg %p163
    // Predicated region
    $region33: #{conv_bn_relu_nchw.1} parent=5 // pred_check
      _
    $region34: #{conv_bn_relu_nchw.1} parent=5 // pred_check_branch
      %166 = sbr.rel (%p163) target = $region36
    $region35: #{conv_bn_relu_nchw.1} parent=5 // pred_region
      %s167 = ssub.s32 %s10, 1
      %p168 = scmp.lt.s32.totalorder %s15, 1
      %s169 = scalar_select %p168, %s15, 1
      %s170 = smul.addr %s169, 2
      %s171 = smul.addr %s170, 4
      %s172 = scalar_lea.vmem %s0, %s171
      %p173 = pneg %p36
      %p174 = pneg %p33
      %p175 = pneg %p57
      %p176 = pneg %p54
      %p177 = pneg %p78
      %p178 = pneg %p75
      %p179 = pneg %p99
      %p180 = pneg %p96
      %p181 = pneg %p125
      %p182 = pneg %p122
      %p183 = scmp.lt.s32.totalorder %s15, 1
      %s184 = scalar_select %p183, %s15, 1
      %s185 = smul.addr %s184, 2
      %s186 = smul.addr %s185, 8
      %s187 = scalar_lea.vmem %s4, %s186
      %p188 = scmp.lt.s32.totalorder %s15, 1
      %s189 = scalar_select %p188, %s15, 1
      %s190 = smul.addr %s189, 2
      %s191 = smul.addr %s190, 4
      %s192 = scalar_lea.vmem %s0, %s191
      %p193 = scmp.lt.s32.totalorder %s15, 1
      %s194 = scalar_select %p193, %s15, 1
      %s195 = smul.addr %s194, 2
      %s196 = smul.addr %s195, 8
      %s197 = scalar_lea.vmem %s4, %s196
      %vm199 = vcmask 516096
      %vm200 = vsmask.f32 256
      %vm201 = vmand %vm199, %vm200
      %v202 = vld [vmem:[#allocation2] sm:$0x1]
      %v203 = vsel %vm201, 0, %v202
      %204 = vst [vmem:[#allocation2] sm:$0x1] %v203
      %v205 = vld [vmem:[%s192] sm:$0xf]
      %v206 = vld [vmem:[%s192 + $0x4] sm:$0xf]
      %v209 = vunpack.c.l.b16 %v205
      %v210 = vunpack.c.l.b16 %v206
      %v211 = vpack.c.b16 %v210, %v209
      %v213 = vshrl.u32 %v211, 16
      %v215 = vrot.slane %v213, 7
      %v216 = vshll.u32 %v211, 16
      %v218 = vor.u32 %v215, %v216
      %vm220 = vcmask 523264
      %vm221 = vsmask.f32 7938
      %vm222 = vmand %vm220, %vm221
      %v223 = vld [vmem:[#allocation2] sm:$0xff]
      %v224 = vsel %vm222, %v218, %v223
      %225 = vst [vmem:[#allocation2] sm:$0xff] %v224
      %v226 = vld [vmem:[%s192] sm:$0xf]
      %v227 = vld [vmem:[%s192 + $0x4] sm:$0xf]
      %v230 = vunpack.c.l.b16 %v226
      %v231 = vunpack.c.l.b16 %v227
      %v232 = vpack.c.b16 %v231, %v230
      %233 = vrot.lane.b32.xlu0 %v232, 64
      %v234 = vpop.permute.xlu0 %233
      %vm236 = vcmask 1048064
      %237 = vst.msk [vmem:[#allocation2] sm:$0xff] %vm236, %v234
      %vm238 = vcmask 523271
      %vm239 = vsmask.f32 7966
      %vm240 = vmand %vm238, %vm239
      %v241 = vld [vmem:[#allocation2 + $0x8] sm:$0x80]
      %v242 = vsel %vm240, 0, %v241
      %243 = vst [vmem:[#allocation2 + $0x8] sm:$0x80] %v242
      %v244 = vld [vmem:[%s192] sm:$0xf]
      %v245 = vld [vmem:[%s192 + $0x4] sm:$0xf]
      %v248 = vunpack.c.l.b16 %v244
      %v249 = vunpack.c.l.b16 %v245
      %v250 = vpack.c.b16 %v249, %v248
      %v252 = vshrl.u32 %v250, 16
      %v254 = vshll.u32 %v250, 16
      %v256 = vrot.slane %v254, 1
      %v257 = vor.u32 %v252, %v256
      %vm259 = vsmask.f32 7424
      %vm260 = vmand %vm220, %vm259
      %v261 = vld [vmem:[#allocation2 + $0x8] sm:$0xff]
      %v262 = vsel %vm260, %v257, %v261
      %263 = vst [vmem:[#allocation2 + $0x8] sm:$0xff] %v262
      %v264 = vld [vmem:[#allocation2] sm:$0xff]
      %v265 = vld [vmem:[#allocation2 + $0x8] sm:$0xff]
      %v266 = vld [vmem:[%s1] sm:$0xf]
      %v267 = vld [vmem:[%s1 + $0x4] sm:$0xf]
      %v268 = vld [vmem:[%s1 + $0x8] sm:$0xf]
      %v269 = vld [vmem:[%s1 + $0xc] sm:$0xf]
      %v270 = vld [vmem:[%s1 + $0x10] sm:$0xf]
      %v271 = vld [vmem:[%s1 + $0x14] sm:$0xf]
      %v272 = vld [vmem:[%s1 + $0x18] sm:$0xf]
      %v273 = vld [vmem:[%s1 + $0x1c] sm:$0xf]
      %v274 = vld [vmem:[%s1 + $0x20] sm:$0xf]
      %v275 = vld [vmem:[%s1 + $0x24] sm:$0xf]
      %v276 = vld [vmem:[%s1 + $0x28] sm:$0xf]
      %v277 = vld [vmem:[%s1 + $0x2c] sm:$0xf]
      %v278 = vld [vmem:[%s1 + $0x30] sm:$0xf]
      %v279 = vld [vmem:[%s1 + $0x34] sm:$0xf]
      %v280 = vld [vmem:[%s1 + $0x38] sm:$0xf]
      %v281 = vld [vmem:[%s1 + $0x3c] sm:$0xf]
      %v282 = vld [vmem:[%s1 + $0x40] sm:$0xf]
      %v283 = vld [vmem:[%s1 + $0x44] sm:$0xf]
      %v284 = vld [vmem:[%s1 + $0x48] sm:$0xf]
      %v285 = vld [vmem:[%s1 + $0x4c] sm:$0xf]
      %v286 = vld [vmem:[%s1 + $0x50] sm:$0xf]
      %v287 = vld [vmem:[%s1 + $0x54] sm:$0xf]
      %v288 = vld [vmem:[%s1 + $0x58] sm:$0xf]
      %v289 = vld [vmem:[%s1 + $0x5c] sm:$0xf]
      %v314 = vunpack.c.l.b16 %v266
      %v315 = vunpack.c.l.b16 %v267
      %v316 = vunpack.c.l.b16 %v268
      %v317 = vunpack.c.l.b16 %v269
      %v318 = vunpack.c.l.b16 %v270
      %v319 = vunpack.c.l.b16 %v271
      %v320 = vunpack.c.l.b16 %v272
      %v321 = vunpack.c.l.b16 %v273
      %v322 = vunpack.c.l.b16 %v274
      %v323 = vunpack.c.l.b16 %v275
      %v324 = vunpack.c.l.b16 %v276
      %v325 = vunpack.c.l.b16 %v277
      %v326 = vunpack.c.l.b16 %v278
      %v327 = vunpack.c.l.b16 %v279
      %v328 = vunpack.c.l.b16 %v280
      %v329 = vunpack.c.l.b16 %v281
      %v330 = vunpack.c.l.b16 %v282
      %v331 = vunpack.c.l.b16 %v283
      %v332 = vunpack.c.l.b16 %v284
      %v333 = vunpack.c.l.b16 %v285
      %v334 = vunpack.c.l.b16 %v286
      %v335 = vunpack.c.l.b16 %v287
      %v336 = vunpack.c.l.b16 %v288
      %v337 = vunpack.c.l.b16 %v289
      %v338 = vpack.c.b16 %v315, %v314
      %v339 = vpack.c.b16 %v317, %v316
      %v340 = vpack.c.b16 %v319, %v318
      %v341 = vpack.c.b16 %v321, %v320
      %v342 = vpack.c.b16 %v323, %v322
      %v343 = vpack.c.b16 %v325, %v324
      %v344 = vpack.c.b16 %v327, %v326
      %v345 = vpack.c.b16 %v329, %v328
      %v346 = vpack.c.b16 %v331, %v330
      %v347 = vpack.c.b16 %v333, %v332
      %v348 = vpack.c.b16 %v335, %v334
      %v349 = vpack.c.b16 %v337, %v336
      %vm362 = vcmask 523264
      %v364 = vsel %vm362, %v265, 0
      %366 = vmatprep.subr.bf16.mxu0 0
      %367 = vmatpush1.bf16.msra.mxu0 %v338
      %368 = vmatprep.subr.bf16.mxu0 0
      %369 = vmatpush1.bf16.msra.mxu0 %v339
      %370 = vmatprep.subr.bf16.mxu0 0
      %371 = vmatpush1.bf16.msra.mxu0 %v340
      %372 = vmatprep.subr.bf16.mxu0 0
      %373 = vmatpush1.bf16.msra.mxu0 %v341
      %374 = vmatprep.subr.bf16.mxu0 0
      %375 = vmatpush1.bf16.msra.mxu0 %v342
      %376 = vmatprep.subr.bf16.mxu0 0
      %377 = vmatpush1.bf16.msra.mxu0 %v343
      %378 = vmatprep.subr.bf16.mxu0 0
      %379 = vmatpush1.bf16.msra.mxu0 %v344
      %380 = vmatprep.subr.bf16.mxu0 0
      %381 = vmatpush1.bf16.msra.mxu0 %v345
      %382 = vmatprep.subr.bf16.mxu0 0
      %383 = vmatpush1.bf16.msra.mxu0 %v346
      %384 = vmatprep.subr.bf16.mxu0 0
      %385 = vmatpush1.bf16.msra.mxu0 %v347
      %386 = vmatprep.subr.bf16.mxu0 0
      %387 = vmatpush1.bf16.msra.mxu0 %v348
      %388 = vmatprep.subr.bf16.mxu0 0
      %389 = vmatpush1.bf16.msra.mxu0 %v349
      %390 = vmatprep.subr.bf16.mxu0 0
      %391 = vmatpush1.bf16.msra.mxu0 0
      %392 = vmatprep.subr.bf16.mxu0 0
      %393 = vmatpush1.bf16.msra.mxu0 0
      %394 = vmatprep.subr.bf16.mxu0 0
      %395 = vmatpush1.bf16.msra.mxu0 0
      %396 = vmatprep.subr.bf16.mxu0 0
      %397 = vmatpush1.bf16.msra.mxu0 0
      %398 = vmatprep.mubr.bf16.mxu0 %v364
      %399 = vmatmul.mubr.bf16.gmra.mrb[0].mxu0 %v264
      %v400 = vpop.f32.mrb[0].mxu0
      %v401 = vadd.f32 0.0, %v400
      %v402 = vpop.f32.mrb[0].mxu0
      %v403 = vpop.f32.mrb[0].mxu0
      %v404 = vadd.f32 0.0, %v403
      %v405 = vpop.f32.mrb[0].mxu0
      %406 = vdwg.mxu0
      %v407 = vld [vmem:[%s2] sm:$0x1]
      %v409 = vlaneseq
      %v410 = vshrl.u32 %v409, 7
      %v411 = vsub.s32 0, %v410
      %v412 = vrot.slane %v407, %v411
      %v414 = vmul.f32 %v401, %v412
      %v415 = vmul.f32 %v404, %v412
      %v416 = vld [vmem:[%s3] sm:$0x1]
      %v418 = vlaneseq
      %v419 = vshrl.u32 %v418, 7
      %v420 = vsub.s32 0, %v419
      %v421 = vrot.slane %v416, %v420
      %v423 = vadd.f32 %v414, %v421
      %v424 = vadd.f32 %v415, %v421
      %v425 = vmax.f32 %v423, 0.0
      %v426 = vmax.f32 %v424, 0.0
      %427 = vst [vmem:[%s197] sm:$0xff] %v425
      %428 = vst [vmem:[%s197 + $0x8] sm:$0xff] %v426
      %p429 = scmp.lt.s32.totalorder %s15, 1
      %s430 = scalar_select %p429, %s15, 1
      %s431 = smul.addr %s430, 2
      %s432 = smul.addr %s431, 8
      %s433 = scalar_lea.vmem %s4, %s432
      // Predicated region
      $region37: #{conv_bn_relu_nchw.1} parent=35 // pred_check
        %p434 = pneg %p122
      $region38: #{conv_bn_relu_nchw.1} parent=35 // pred_check_branch
        %436 = sbr.rel (%p434) target = $region40
      $region39: #{conv_bn_relu_nchw.1} parent=35 // pred_region
        _
      $region40: #{conv_bn_relu_nchw.1} parent=35 // pred_fallthru
        _
    $region36: #{conv_bn_relu_nchw.1} parent=5 // pred_fallthru
      _
    %p437 = scmp.le.s32.totalorder 2, %s10
    // Predicated region
    $region41: #{conv_bn_relu_nchw.1} parent=5 // pred_check
      %p438 = pneg %p437
    $region42: #{conv_bn_relu_nchw.1} parent=5 // pred_check_branch
      %440 = sbr.rel (%p438) target = $region44
    $region43: #{conv_bn_relu_nchw.1} parent=5 // pred_region
      %s441 = ssub.s32 %s10, 2
      // Predicated region
      $region45: #{conv_bn_relu_nchw.1} parent=43 // pred_check
        %p442 = pneg %p128
      $region46: #{conv_bn_relu_nchw.1} parent=43 // pred_check_branch
        %444 = sbr.rel (%p442) target = $region48
      $region47: #{conv_bn_relu_nchw.1} parent=43 // pred_region
        %p445 = scmp.lt.s32.totalorder %s16, 1
        %s446 = scalar_select %p445, %s16, 1
        %s447 = smul.addr %s446, 2
        %s448 = smul.addr %s447, 8
        %s449 = scalar_lea.vmem %s4, %s448
      $region48: #{conv_bn_relu_nchw.1} parent=43 // pred_fallthru
        _
    $region44: #{conv_bn_relu_nchw.1} parent=5 // pred_fallthru
      _
  $region6: #{conv_bn_relu_nchw.1} parent=0 // loop_footer
    %s14 = sadd.s32 1, %s10
  $region7: #{conv_bn_relu_nchw.1} parent=0 // loop_footer_branch
    %9 = sbr.rel target = $region3
  $region8: #{conv_bn_relu_nchw.1} parent=0 // loop_exit
    _

</llo_original>
